<compile_context>
chip_gen: v6e
topology: v6e:2x2x1
jax: 0.10.0
libtpu: 0.0.40
codegen_flags: <defaults>
</compile_context>

<pallas_src>
import functools

import jax
import jax.numpy as jnp
from jax.experimental import pallas as pl
from jax.experimental.pallas import tpu as pltpu

_LANES = 128            # vreg lane width: lane-dense last dim => unmasked stores
_MAX_TILE_ROWS = 4096   # 4096 x 128 x 4 B = 2 MiB per f32 block; double-buffered
                        # in + out = ~8 MiB, safe on every TPU generation.


def _encoder_identity_kernel(x_ref, o_ref):
    # Abstract Encoder defines no transformation: pure pass-through.
    o_ref[...] = x_ref[...]


def _tiled_identity_2d(x2):
    """Lane-dense tiled identity copy of a (rows, lanes) array."""
    rows, lanes = x2.shape
    # tile_rows is either the full extent (rows < _MAX_TILE_ROWS) or a
    # multiple of 8, so the (8, 128) block constraint is always satisfied.
    tile_rows = min(_MAX_TILE_ROWS, rows)
    grid = (pl.cdiv(rows, tile_rows),)
    spec = pl.BlockSpec((tile_rows, lanes), lambda i: (i, 0))
    # NOTE: if profiling ever shows exposed DMA here, pipeline_mode=pl.Buffered(3)
    # on the input spec is the next (low-value) lever.
    return pl.pallas_call(
        _encoder_identity_kernel,
        out_shape=jax.ShapeDtypeStruct(x2.shape, x2.dtype),
        grid_spec=pltpu.PrefetchScalarGridSpec(
            num_scalar_prefetch=0,
            grid=grid,
            in_specs=[spec],
            out_specs=spec,
        ),
        # Identity path: alias the (donated) input HBM buffer as the output so
        # no second HBM buffer is materialized.
        input_output_aliases={0: 0},
        compiler_params=pltpu.CompilerParams(
            dimension_semantics=("parallel",),   # independent blocks; megacore-shard
            vmem_limit_bytes=48 * 1024 * 1024,   # headroom for big lane-dense tiles
        ),
    )(x2)


@functools.partial(jax.jit, donate_argnums=(0,))
def encoder_forward(x):
    """Pallas 'forward' for the abstract Encoder: identity on X.

    X is flattened to a lane-dense 2-D view (a free bitcast for a contiguous
    array), copied through a tiled, aliased Pallas kernel, and reshaped back.
    The caller's buffer is donated and reused for the output.
    """
    orig_shape = x.shape
    total = x.size
    if total % _LANES == 0:
        x2 = x.reshape(total // _LANES, _LANES)   # lane-dense view
    else:
        # TODO(synk): element counts not a multiple of 128 fall back to a single
        # full-extent block (legal, but stores are lane-masked).
        x2 = x.reshape(1, total)
    y2 = _tiled_identity_2d(x2)
    return y2.reshape(orig_shape)


if __name__ == "__main__":
    key = jax.random.PRNGKey(0)
    # Small shapes consistent with an encoder input: batch=2, seq=8, hidden=32.
    x = jax.random.normal(key, (2, 8, 32), dtype=jnp.float32)

    # x is donated into encoder_forward (its buffer becomes the output), so
    # snapshot it to host first for the correctness check.
    x_expected = jax.device_get(x)

    y = encoder_forward(x)
    y = jax.block_until_ready(y)

    # The abstract forward has no semantics beyond "takes X"; verify the
    # identity kernel round-trips the data exactly.
    assert y.shape == x_expected.shape and y.dtype == x_expected.dtype
    assert bool(jnp.array_equal(y, x_expected))

    print("KERNEL_OK")
</pallas_src>

<mosaic_0001>
module attributes {stable_mosaic.version = 11 : i64} {
  func.func @_encoder_identity_kernel(%arg0: i32, %arg1: memref<4x128xf32, #tpu.memory_space<vmem>>, %arg2: memref<4x128xf32, #tpu.memory_space<vmem>>) attributes {dimension_semantics = [#tpu.dimension_semantics<parallel>], iteration_bounds = array<i64: 1>, scalar_prefetch = 0 : i64, scratch_operands = 0 : i64, tpu.core_type = #tpu.core_type<tc>, window_params = [{transform_indices = @transform_0, window_bounds = array<i64: 4, 128>}, {transform_indices = @transform_1, window_bounds = array<i64: 4, 128>}]} {
    %c0 = arith.constant 0 : index
    %c0_0 = arith.constant 0 : index
    %0 = vector.load %arg1[%c0, %c0_0] : memref<4x128xf32, #tpu.memory_space<vmem>>, vector<4x128xf32>
    %c0_1 = arith.constant 0 : index
    %c0_2 = arith.constant 0 : index
    %1 = vector.load %arg2[%c0_1, %c0_2] : memref<4x128xf32, #tpu.memory_space<vmem>>, vector<4x128xf32>
    tpu.vector_store %arg2[%c0_1, %c0_2], %0 {strides = array<i32>} : memref<4x128xf32, #tpu.memory_space<vmem>>, vector<4x128xf32>,
    return
  }
  func.func @transform_0(%arg0: i32) -> (i32, i32) {
    %c0_i32 = arith.constant 0 : i32
    %c0_i32_0 = arith.constant 0 : i32
    return %arg0, %c0_i32 : i32, i32
  }
  func.func @transform_1(%arg0: i32) -> (i32, i32) {
    %c0_i32 = arith.constant 0 : i32
    %c0_i32_0 = arith.constant 0 : i32
    return %arg0, %c0_i32 : i32, i32
  }
}

</mosaic_0001>

<llo_original>
// kernel: encoder_forward.1
$region0: #{encoder_forward.1}
  #allocation0 [shape = 'u32[]', space=smem, size = 0x4, offset = 0x4, fixed_abs, tag = 'smem constant byte address 0x4 - core index']
  #allocation1 [shape = 'u32[144,128]{1,0:T(1,128)}', space=vmem, size = 0x12000, scoped, tag = 'internal scratch']
  %s0 = inlined_call_operand.vmem [shape: f32[4,128], index: 0, kind: input, shape index: {}, may-alias: {0,1}]
  %s1 = inlined_call_operand.vmem [shape: f32[4,128], index: 1, kind: output, shape index: {}, may-alias: {0,1}]
  %s2 = sld [smem:[#allocation0]]
  $region14: #{encoder_forward.1} parent=0
    _
  %s4 = ssub.s32 1, %s2
  %s5 = scalar_select 0, %s4, %s2
  // Predicated region
  $region2: #{encoder_forward.1} parent=0 // pred_check
    _
  $region3: #{encoder_forward.1} parent=0 // pred_check_branch
    %7 = sbr.rel (0) target = $region5
  $region4: #{encoder_forward.1} parent=0 // pred_region
    _
  $region5: #{encoder_forward.1} parent=0 // pred_fallthru
    _
  %v8 = vld [vmem:[%s0] sm:$0xf]
  %9 = vst [vmem:[%s1] sm:$0xf] %v8
  // Predicated region
  $region6: #{encoder_forward.1} parent=0 // pred_check
    _
  $region7: #{encoder_forward.1} parent=0 // pred_check_branch
    %11 = sbr.rel (0) target = $region9
  $region8: #{encoder_forward.1} parent=0 // pred_region
    _
  $region9: #{encoder_forward.1} parent=0 // pred_fallthru
    _
  // Predicated region
  $region10: #{encoder_forward.1} parent=0 // pred_check
    _
  $region11: #{encoder_forward.1} parent=0 // pred_check_branch
    %13 = sbr.rel (0) target = $region13
  $region12: #{encoder_forward.1} parent=0 // pred_region
    _
  $region13: #{encoder_forward.1} parent=0 // pred_fallthru
    _

</llo_original>
